<compile_context>
chip_gen: v5e
topology: v5e:2x2
jax: 0.10.0
libtpu: 0.0.40
codegen_flags: <defaults>
</compile_context>

<pallas_src>
import jax
import jax.numpy as jnp
from jax.experimental import pallas as pl
from jax.experimental.pallas import tpu as pltpu

_LANE = 128     # lane width (keep 128 even on 2x256-MXU chips: kernel is HBM-bound)
_SUBLANE = 8    # f32 sublane height


def _round_up(n, m):
    return ((n + m - 1) // m) * m


def _mlp_kernel(x_ref, w1_ref, b1_ref, w2_ref, b2_ref, o_ref):
    # x_ref:  [TB, K]   f32   (cast to bf16 in-kernel; VPU cast hidden under HBM)
    # w1_ref: [K,  Hp]  bf16  (Hp = hidden padded to 128 lanes)
    # b1_ref: [1,  Hp]  f32
    # w2_ref: [Hp, N]   bf16  (N = output_nc, un-padded)
    # b2_ref: [1,  N]   f32
    # o_ref:  [TB, N]   f32   (narrow store; masked vst cost hidden under HBM)
    x = x_ref[...].astype(jnp.bfloat16)
    h = jnp.dot(x, w1_ref[...], preferred_element_type=jnp.float32)
    h = jnp.maximum(h + b1_ref[...], 0.0)                      # ReLU(True), f32
    y = jnp.dot(h.astype(jnp.bfloat16), w2_ref[...],
                preferred_element_type=jnp.float32)
    o_ref[...] = jnp.maximum(y + b2_ref[...], 0.0).astype(o_ref.dtype)  # ReLU()


def prepare_params(params):
    """One-time conversion of nn.Linear-layout params ([out, in]) into kernel
    layout: transposed to [in, out], hidden padded to 128 lanes, weights bf16,
    biases f32 as [1, dim] rows. Returns arrays only (no Python-int metadata
    inside the traced pytree)."""
    w1, b1, w2, b2 = params            # w1: [H, K], b1: [H], w2: [N, H], b2: [N]
    hidden, input_nc = w1.shape
    output_nc = w2.shape[0]
    h_pad = _round_up(hidden, _LANE)

    w1_t = jnp.zeros((input_nc, h_pad), jnp.bfloat16)
    w1_t = w1_t.at[:, :hidden].set(jnp.transpose(w1).astype(jnp.bfloat16))
    b1_p = jnp.zeros((1, h_pad), jnp.float32).at[0, :hidden].set(b1)

    w2_t = jnp.zeros((h_pad, output_nc), jnp.bfloat16)
    w2_t = w2_t.at[:hidden, :].set(jnp.transpose(w2).astype(jnp.bfloat16))
    b2_p = b2.reshape(1, output_nc).astype(jnp.float32)

    return dict(w1=w1_t, b1=b1_p, w2=w2_t, b2=b2_p)


def _choose_tile_b(B, max_tile=4096):
    # Big enough to amortize the ~0.35us per-grid-step overhead (a 4K-row step
    # moves O(1) MB), small enough that double-buffered x/out tiles stay a few
    # MiB — well inside even v5e's scoped-VMEM limit. Multiple of 8 sublanes.
    if B <= max_tile:
        return B                        # block equals full dim -> always legal
    return max(_SUBLANE, (max_tile // _SUBLANE) * _SUBLANE)


@jax.jit
def resnet_generator_forward(x, w1, b1, w2, b2):
    """Forward pass of ResnetGenerator (MLP path).

    x: [B, input_nc] f32.  w1: [input_nc, h_pad] bf16, b1: [1, h_pad] f32,
    w2: [h_pad, output_nc] bf16, b2: [1, output_nc] f32 (from prepare_params).
    All dimensions are derived from static array shapes (jit-safe).
    """
    B, input_nc = x.shape
    assert input_nc == w1.shape[0], "x feature dim must match w1"
    h_pad = w1.shape[1]
    output_nc = w2.shape[1]

    tile_b = _choose_tile_b(B)
    grid = (pl.cdiv(B, tile_b),)

    # Advisory cost hint for the XLA scheduler (helps overlap at small B).
    flops = 2 * B * (input_nc * h_pad + h_pad * output_nc)
    bytes_accessed = (B * input_nc * 4            # x read (f32)
                      + B * output_nc * 4         # out write (f32)
                      + input_nc * h_pad * 2      # w1 (bf16)
                      + h_pad * output_nc * 2     # w2 (bf16)
                      + (h_pad + output_nc) * 4)  # biases (f32)
    cost = pl.CostEstimate(flops=flops, transcendentals=0,
                           bytes_accessed=bytes_accessed)

    return pl.pallas_call(
        _mlp_kernel,
        out_shape=jax.ShapeDtypeStruct((B, output_nc), jnp.float32),
        grid_spec=pltpu.PrefetchScalarGridSpec(
            num_scalar_prefetch=0,
            grid=grid,
            in_specs=[
                pl.BlockSpec((tile_b, input_nc), lambda i: (i, 0)),   # f32 x
                pl.BlockSpec((input_nc, h_pad), lambda i: (0, 0)),
                pl.BlockSpec((1, h_pad), lambda i: (0, 0)),
                pl.BlockSpec((h_pad, output_nc), lambda i: (0, 0)),
                pl.BlockSpec((1, output_nc), lambda i: (0, 0)),
            ],
            out_specs=pl.BlockSpec((tile_b, output_nc), lambda i: (i, 0)),
        ),
        compiler_params=pltpu.CompilerParams(
            dimension_semantics=("parallel",),     # shards batch tiles on v7x TCs
            vmem_limit_bytes=32 * 1024 * 1024,     # covers double-buffered tiles
        ),
        cost_estimate=cost,
    )(x, w1, b1, w2, b2)


def init_params(key, input_nc, output_nc, hidden=64):
    """Deterministic init mirroring nn.Linear shapes (weight: [out, in])."""
    k1, k2, k3, k4 = jax.random.split(key, 4)
    bound1 = 1.0 / (input_nc ** 0.5)
    bound2 = 1.0 / (hidden ** 0.5)
    w1 = jax.random.uniform(k1, (hidden, input_nc), jnp.float32, -bound1, bound1)
    b1 = jax.random.uniform(k2, (hidden,), jnp.float32, -bound1, bound1)
    w2 = jax.random.uniform(k3, (output_nc, hidden), jnp.float32, -bound2, bound2)
    b2 = jax.random.uniform(k4, (output_nc,), jnp.float32, -bound2, bound2)
    return (w1, b1, w2, b2)


def _reference_forward(x, params):
    w1, b1, w2, b2 = params
    h = jnp.maximum(x @ w1.T + b1, 0.0)
    return jnp.maximum(h @ w2.T + b2, 0.0)


if __name__ == "__main__":
    key = jax.random.PRNGKey(0)
    k_x, k_p = jax.random.split(key)

    B, input_nc, output_nc = 8, 32, 16
    x = jax.random.normal(k_x, (B, input_nc), dtype=jnp.float32)
    params = init_params(k_p, input_nc, output_nc)
    prepared = prepare_params(params)            # hoisted one-time prep (arrays only)

    out = resnet_generator_forward(
        x, prepared["w1"], prepared["b1"], prepared["w2"], prepared["b2"])
    out = jax.block_until_ready(out)

    ref = _reference_forward(x, params)
    assert out.shape == (B, output_nc)
    # bf16 matmul operands (f32 accumulation) -> loosened tolerance vs f32 ref.
    assert jnp.allclose(out, ref, atol=2e-2, rtol=2e-2), "mismatch vs reference"

    print("KERNEL_OK")
</pallas_src>

<mosaic_0001>
module attributes {stable_mosaic.version = 11 : i64} {
  func.func @_mlp_kernel(%arg0: i32, %arg1: memref<8x32xf32, #tpu.memory_space<vmem>>, %arg2: memref<32x128xbf16, #tpu.memory_space<vmem>>, %arg3: memref<1x128xf32, #tpu.memory_space<vmem>>, %arg4: memref<128x16xbf16, #tpu.memory_space<vmem>>, %arg5: memref<1x16xf32, #tpu.memory_space<vmem>>, %arg6: memref<8x16xf32, #tpu.memory_space<vmem>>) attributes {dimension_semantics = [#tpu.dimension_semantics<parallel>], iteration_bounds = array<i64: 1>, scalar_prefetch = 0 : i64, scratch_operands = 0 : i64, tpu.core_type = #tpu.core_type<tc>, window_params = [{transform_indices = @transform_0, window_bounds = array<i64: 8, 32>}, {pipeline_mode = #tpu.pipeline_mode<synchronous>, transform_indices = @transform_1, window_bounds = array<i64: 32, 128>}, {pipeline_mode = #tpu.pipeline_mode<synchronous>, transform_indices = @transform_2, window_bounds = array<i64: 1, 128>}, {pipeline_mode = #tpu.pipeline_mode<synchronous>, transform_indices = @transform_3, window_bounds = array<i64: 128, 16>}, {pipeline_mode = #tpu.pipeline_mode<synchronous>, transform_indices = @transform_4, window_bounds = array<i64: 1, 16>}, {transform_indices = @transform_5, window_bounds = array<i64: 8, 16>}]} {
    %c0 = arith.constant 0 : index
    %c0_0 = arith.constant 0 : index
    %0 = vector.load %arg1[%c0, %c0_0] : memref<8x32xf32, #tpu.memory_space<vmem>>, vector<8x32xf32>
    %1 = arith.truncf %0 : vector<8x32xf32> to vector<8x32xbf16>
    %c0_1 = arith.constant 0 : index
    %c0_2 = arith.constant 0 : index
    %2 = vector.load %arg2[%c0_1, %c0_2] : memref<32x128xbf16, #tpu.memory_space<vmem>>, vector<32x128xbf16>
    %cst = arith.constant dense<0.000000e+00> : vector<8x128xf32>
    %3 = tpu.matmul %1, %2, %cst {dimension_numbers = #tpu.dot_dimension_numbers<[1], [0], [0], [1], [0, 0, 1, 1], [], []>} : vector<8x32xbf16>, vector<32x128xbf16>, vector<8x128xf32> -> vector<8x128xf32>
    %c0_3 = arith.constant 0 : index
    %c0_4 = arith.constant 0 : index
    %4 = vector.load %arg3[%c0_3, %c0_4] : memref<1x128xf32, #tpu.memory_space<vmem>>, vector<1x128xf32>
    %5 = vector.broadcast %4 : vector<1x128xf32> to vector<8x128xf32>
    %6 = arith.addf %3, %5 : vector<8x128xf32>
    %cst_5 = arith.constant 0.000000e+00 : f32
    %7 = vector.broadcast %cst_5 : f32 to vector<8x128xf32>
    %8 = arith.maximumf %6, %7 : vector<8x128xf32>
    %9 = arith.truncf %8 : vector<8x128xf32> to vector<8x128xbf16>
    %c0_6 = arith.constant 0 : index
    %c0_7 = arith.constant 0 : index
    %10 = vector.load %arg4[%c0_6, %c0_7] : memref<128x16xbf16, #tpu.memory_space<vmem>>, vector<128x16xbf16>
    %cst_8 = arith.constant dense<0.000000e+00> : vector<8x16xf32>
    %11 = tpu.matmul %9, %10, %cst_8 {dimension_numbers = #tpu.dot_dimension_numbers<[1], [0], [0], [1], [0, 0, 1, 1], [], []>} : vector<8x128xbf16>, vector<128x16xbf16>, vector<8x16xf32> -> vector<8x16xf32>
    %c0_9 = arith.constant 0 : index
    %c0_10 = arith.constant 0 : index
    %12 = vector.load %arg5[%c0_9, %c0_10] : memref<1x16xf32, #tpu.memory_space<vmem>>, vector<1x16xf32>
    %13 = vector.broadcast %12 : vector<1x16xf32> to vector<8x16xf32>
    %14 = arith.addf %11, %13 : vector<8x16xf32>
    %cst_11 = arith.constant 0.000000e+00 : f32
    %15 = vector.broadcast %cst_11 : f32 to vector<8x16xf32>
    %16 = arith.maximumf %14, %15 : vector<8x16xf32>
    %c0_12 = arith.constant 0 : index
    %c0_13 = arith.constant 0 : index
    %17 = vector.load %arg6[%c0_12, %c0_13] : memref<8x16xf32, #tpu.memory_space<vmem>>, vector<8x16xf32>
    tpu.vector_store %arg6[%c0_12, %c0_13], %16 {strides = array<i32>} : memref<8x16xf32, #tpu.memory_space<vmem>>, vector<8x16xf32>,
    return
  }
  func.func @transform_0(%arg0: i32) -> (i32, i32) {
    %c0_i32 = arith.constant 0 : i32
    %c0_i32_0 = arith.constant 0 : i32
    return %arg0, %c0_i32 : i32, i32
  }
  func.func @transform_1(%arg0: i32) -> (i32, i32) {
    %c0_i32 = arith.constant 0 : i32
    %c0_i32_0 = arith.constant 0 : i32
    %c0_i32_1 = arith.constant 0 : i32
    return %c0_i32, %c0_i32_0 : i32, i32
  }
  func.func @transform_2(%arg0: i32) -> (i32, i32) {
    %c0_i32 = arith.constant 0 : i32
    %c0_i32_0 = arith.constant 0 : i32
    %c0_i32_1 = arith.constant 0 : i32
    return %c0_i32, %c0_i32_0 : i32, i32
  }
  func.func @transform_3(%arg0: i32) -> (i32, i32) {
    %c0_i32 = arith.constant 0 : i32
    %c0_i32_0 = arith.constant 0 : i32
    %c0_i32_1 = arith.constant 0 : i32
    return %c0_i32, %c0_i32_0 : i32, i32
  }
  func.func @transform_4(%arg0: i32) -> (i32, i32) {
    %c0_i32 = arith.constant 0 : i32
    %c0_i32_0 = arith.constant 0 : i32
    %c0_i32_1 = arith.constant 0 : i32
    return %c0_i32, %c0_i32_0 : i32, i32
  }
  func.func @transform_5(%arg0: i32) -> (i32, i32) {
    %c0_i32 = arith.constant 0 : i32
    %c0_i32_0 = arith.constant 0 : i32
    return %arg0, %c0_i32 : i32, i32
  }
}

</mosaic_0001>

<llo_original>
// kernel: resnet_generator_forward.1
$region0: #{resnet_generator_forward.1}
  #allocation0 [shape = 'u32[]', space=smem, size = 0x4, offset = 0x4, fixed_abs, tag = 'smem constant byte address 0x4 - core index']
  #allocation1 [shape = 'u32[72,128]{1,0:T(1,128)}', space=vmem, size = 0x9000, scoped, tag = 'internal scratch']
  %s0 = inlined_call_operand.vmem [shape: f32[8,32], index: 0, kind: input, shape index: {}]
  %s1 = inlined_call_operand.vmem [shape: bf16[32,128], index: 1, kind: input, shape index: {}]
  %s2 = inlined_call_operand.vmem [shape: f32[1,128], index: 2, kind: input, shape index: {}]
  %s3 = inlined_call_operand.vmem [shape: bf16[128,16], index: 3, kind: input, shape index: {}]
  %s4 = inlined_call_operand.vmem [shape: f32[1,16], index: 4, kind: input, shape index: {}]
  %s5 = inlined_call_operand.hbm [shape: f32[8,16], index: 5, kind: output, shape index: {}]
  %s6 = sld [smem:[#allocation0]]
  $region30: #{resnet_generator_forward.1} parent=0
    _
  %s8 = ssub.s32 1, %s6
  %s9 = scalar_select 0, %s8, %s6
  $region1: #{resnet_generator_forward.1} parent=0
    #allocation2 [shape = 'u8[4096]{0}', space=vmem, size = 0x1000, scoped, tag = 'output window, operand 0, single buffered']
    #allocation3 [shape = 's32[1]{0}', space=sflag, size = 0x4, scoped, tag = 'scoped memory for resnet_generator_forward.1']
    %10 = vsyncpa [#allocation3], 0
    // Predicated region
    $region2: #{resnet_generator_forward.1} parent=1 // pred_check
      _
    $region3: #{resnet_generator_forward.1} parent=1 // pred_check_branch
      %12 = sbr.rel (0) target = $region5
    $region4: #{resnet_generator_forward.1} parent=1 // pred_region
      _
    $region5: #{resnet_generator_forward.1} parent=1 // pred_fallthru
      _
    // Predicated region
    $region6: #{resnet_generator_forward.1} parent=1 // pred_check
      _
    $region7: #{resnet_generator_forward.1} parent=1 // pred_check_branch
      %14 = sbr.rel (0) target = $region9
    $region8: #{resnet_generator_forward.1} parent=1 // pred_region
      _
    $region9: #{resnet_generator_forward.1} parent=1 // pred_fallthru
      _
    // Predicated region
    $region10: #{resnet_generator_forward.1} parent=1 // pred_check
      _
    $region11: #{resnet_generator_forward.1} parent=1 // pred_check_branch
      %16 = sbr.rel (0) target = $region13
    $region12: #{resnet_generator_forward.1} parent=1 // pred_region
      _
    $region13: #{resnet_generator_forward.1} parent=1 // pred_fallthru
      _
    // Predicated region
    $region14: #{resnet_generator_forward.1} parent=1 // pred_check
      _
    $region15: #{resnet_generator_forward.1} parent=1 // pred_check_branch
      %18 = sbr.rel (0) target = $region17
    $region16: #{resnet_generator_forward.1} parent=1 // pred_region
      _
    $region17: #{resnet_generator_forward.1} parent=1 // pred_fallthru
      _
    // Predicated region
    $region18: #{resnet_generator_forward.1} parent=1 // pred_check
      _
    $region19: #{resnet_generator_forward.1} parent=1 // pred_check_branch
      %20 = sbr.rel (0) target = $region21
    $region20: #{resnet_generator_forward.1} parent=1 // pred_region
      _
    $region21: #{resnet_generator_forward.1} parent=1 // pred_fallthru
      _
    %v22 = vld [vmem:[%s0] sm:$0xff]
    %v23 = vpack.c.bf16 %v22, %v22
    %v24 = vld [vmem:[%s1] sm:$0xf]
    %v25 = vld [vmem:[%s1 + $0x4] sm:$0xf]
    %v26 = vld [vmem:[%s1 + $0x8] sm:$0xf]
    %v27 = vld [vmem:[%s1 + $0xc] sm:$0xf]
    %v28 = vld [vmem:[%s2] sm:$0x1]
    %v30 = vperm.slane %v28, 0
    %v36 = vunpack.c.l.b16 %v24
    %v37 = vunpack.c.l.b16 %v25
    %v38 = vunpack.c.l.b16 %v26
    %v39 = vunpack.c.l.b16 %v27
    %v40 = vpack.c.b16 %v37, %v36
    %v41 = vpack.c.b16 %v39, %v38
    %vm44 = vcmask 261120
    %v46 = vsel %vm44, %v23, 0
    %48 = vmatpush.bf16.msra.mxu0 0
    %49 = vmatpush.bf16.msra.mxu0 0
    %50 = vmatpush.bf16.msra.mxu0 0
    %51 = vmatpush.bf16.msra.mxu0 0
    %52 = vmatpush.bf16.msra.mxu0 0
    %53 = vmatpush.bf16.msra.mxu0 0
    %54 = vmatpush.bf16.msra.mxu0 %v41
    %55 = vmatpush.bf16.msra.mxu0 %v40
    %56 = vmatmul.bf16.gmra.mxu0 %v46
    %v57 = vpop.f32.mrf.mxu0
    %v58 = vadd.f32 %v30, %v57
    %v59 = vpop.f32.mrf.mxu0
    %60 = vdwg.mxu0
    %v61 = vmax.f32 %v58, 0.0
    %v62 = vpack.c.bf16 %v61, %v61
    %v63 = vld [vmem:[%s3] sm:$0xf]
    %v64 = vld [vmem:[%s3 + $0x4] sm:$0xf]
    %v65 = vld [vmem:[%s3 + $0x8] sm:$0xf]
    %v66 = vld [vmem:[%s3 + $0xc] sm:$0xf]
    %v67 = vld [vmem:[%s3 + $0x10] sm:$0xf]
    %v68 = vld [vmem:[%s3 + $0x14] sm:$0xf]
    %v69 = vld [vmem:[%s3 + $0x18] sm:$0xf]
    %v70 = vld [vmem:[%s3 + $0x1c] sm:$0xf]
    %v71 = vld [vmem:[%s3 + $0x20] sm:$0xf]
    %v72 = vld [vmem:[%s3 + $0x24] sm:$0xf]
    %v73 = vld [vmem:[%s3 + $0x28] sm:$0xf]
    %v74 = vld [vmem:[%s3 + $0x2c] sm:$0xf]
    %v75 = vld [vmem:[%s3 + $0x30] sm:$0xf]
    %v76 = vld [vmem:[%s3 + $0x34] sm:$0xf]
    %v77 = vld [vmem:[%s3 + $0x38] sm:$0xf]
    %v78 = vld [vmem:[%s3 + $0x3c] sm:$0xf]
    %v79 = vld [vmem:[%s4] sm:$0x1]
    %v81 = vperm.slane %v79, 0
    %v99 = vunpack.c.l.b16 %v63
    %v100 = vunpack.c.l.b16 %v64
    %v101 = vunpack.c.l.b16 %v65
    %v102 = vunpack.c.l.b16 %v66
    %v103 = vunpack.c.l.b16 %v67
    %v104 = vunpack.c.l.b16 %v68
    %v105 = vunpack.c.l.b16 %v69
    %v106 = vunpack.c.l.b16 %v70
    %v107 = vunpack.c.l.b16 %v71
    %v108 = vunpack.c.l.b16 %v72
    %v109 = vunpack.c.l.b16 %v73
    %v110 = vunpack.c.l.b16 %v74
    %v111 = vunpack.c.l.b16 %v75
    %v112 = vunpack.c.l.b16 %v76
    %v113 = vunpack.c.l.b16 %v77
    %v114 = vunpack.c.l.b16 %v78
    %v115 = vpack.c.b16 %v100, %v99
    %v116 = vpack.c.b16 %v102, %v101
    %v117 = vpack.c.b16 %v104, %v103
    %v118 = vpack.c.b16 %v106, %v105
    %v119 = vpack.c.b16 %v108, %v107
    %v120 = vpack.c.b16 %v110, %v109
    %v121 = vpack.c.b16 %v112, %v111
    %v122 = vpack.c.b16 %v114, %v113
    %131 = vmatpush.bf16.msra.mxu0 %v122
    %132 = vmatpush.bf16.msra.mxu0 %v121
    %133 = vmatpush.bf16.msra.mxu0 %v120
    %134 = vmatpush.bf16.msra.mxu0 %v119
    %135 = vmatpush.bf16.msra.mxu0 %v118
    %136 = vmatpush.bf16.msra.mxu0 %v117
    %137 = vmatpush.bf16.msra.mxu0 %v116
    %138 = vmatpush.bf16.msra.mxu0 %v115
    %139 = vmatmul.bf16.gmra.mxu0 %v62
    %v140 = vpop.f32.mrf.mxu0
    %v141 = vadd.f32 %v81, %v140
    %v142 = vpop.f32.mrf.mxu0
    %143 = vdwg.mxu0
    %v144 = vmax.f32 %v141, 0.0
    %vm145 = vcmask 130048
    %146 = vst.msk [vmem:[#allocation2] sm:$0xff] %vm145, %v144
    // Predicated region
    $region22: #{resnet_generator_forward.1} parent=1 // pred_check
      _
    $region23: #{resnet_generator_forward.1} parent=1 // pred_check_branch
      %148 = sbr.rel (0) target = $region25
    $region24: #{resnet_generator_forward.1} parent=1 // pred_region
      %150 = vsyncadd [#allocation3], 0
      %s152 = sshll.u32 [#allocation2], 4
      %s153 = int_to_ptr.vmem [resolvable:$true] %s152
      %s154 = sshll.u32 %s5, 4
      %s155 = int_to_ptr.hbm [resolvable:$true] %s154
      %157 = dma.vmem_to_hbm [thread:$0]  %s153, 128, %s155, [#allocation3]
    $region25: #{resnet_generator_forward.1} parent=1 // pred_fallthru
      _
    // Predicated region
    $region26: #{resnet_generator_forward.1} parent=1 // pred_check
      _
    $region27: #{resnet_generator_forward.1} parent=1 // pred_check_branch
      %159 = sbr.rel (0) target = $region29
    $region28: #{resnet_generator_forward.1} parent=1 // pred_region
      %161 = dma.done [#allocation3], 128
    $region29: #{resnet_generator_forward.1} parent=1 // pred_fallthru
      _
    %162 = vsyncpa [#allocation3], 1

</llo_original>
